<compile_context>
chip_gen: v7x
topology: tpu7x:2x2x1
jax: 0.10.0
libtpu: 0.0.40
codegen_flags: <defaults>
</compile_context>

<pallas_src>
import math

import jax
import jax.numpy as jnp
from jax.experimental import pallas as pl
from jax.experimental.pallas import tpu as pltpu


def _round_up(a: int, b: int) -> int:
    return ((a + b - 1) // b) * b


def _glu_mlp_kernel(x_ref, w1v_ref, w1g_ref, b1v_ref, b1g_ref, w2_ref, b2_ref, o_ref):
    # x_ref:   (tm, C_in)        token tile
    # w1v_ref: (C_in, H/2)       fc1 value half   (transposed vs PyTorch)
    # w1g_ref: (C_in, H/2)       fc1 gate half
    # b1v_ref: (1, H/2), b1g_ref: (1, H/2)
    # w2_ref:  (H/2, C_out), b2_ref: (1, C_out)
    x = x_ref[...]
    v = jnp.dot(x, w1v_ref[...], preferred_element_type=jnp.float32) + b1v_ref[...]
    g = jnp.dot(x, w1g_ref[...], preferred_element_type=jnp.float32) + b1g_ref[...]
    # GLU gating; sigmoid = exp + reciprocal -> EUP slot, overlaps MXU work.
    gated = v * jax.nn.sigmoid(g)
    gated = gated.astype(w2_ref.dtype)
    y = jnp.dot(gated, w2_ref[...], preferred_element_type=jnp.float32) + b2_ref[...]
    o_ref[...] = y.astype(o_ref.dtype)


def glu_mlp_pallas(x, w1, b1, w2, b2, *, tm=256, compute_dtype=None):
    """GluMlp forward.

    x:  (B, N, C_in)
    w1: (C_in, C_hid)   (transposed vs PyTorch fc1.weight), C_hid even
    b1: (C_hid,)
    w2: (C_hid // 2, C_out)
    b2: (C_out,)
    compute_dtype: e.g. jnp.bfloat16 to hit MXU bf16 peak on v6e/v7x
                   (f32 accumulation is kept either way).
    """
    B, N, C_in = x.shape
    C_hid = w1.shape[1]
    assert C_hid % 2 == 0, "GluMlp requires an even hidden dimension"
    half = C_hid // 2
    C_out = w2.shape[1]
    assert w2.shape[0] == half

    tokens = B * N
    # Token tile: as large as requested, but never larger than the (8-aligned)
    # padded token count.  Second-to-last block dim stays a multiple of 8.
    tm_eff = min(tm, _round_up(tokens, 8))
    padded = _round_up(tokens, tm_eff)

    x2d = x.reshape(tokens, C_in)
    if padded != tokens:
        # cdiv-style padding instead of a divisibility assert; padded rows are
        # computed and discarded (finite values, no NaN risk).
        x2d = jnp.pad(x2d, ((0, padded - tokens), (0, 0)))

    # Split fc1 into value / gate halves so the kernel never slices the fc1
    # output across lanes.  PyTorch chunk(2, -1): first half = value, second
    # half = gates.
    w1v, w1g = w1[:, :half], w1[:, half:]
    b1v = b1[:half].reshape(1, half)
    b1g = b1[half:].reshape(1, half)
    b2_2d = b2.reshape(1, C_out)

    w2c = w2
    if compute_dtype is not None:
        x2d = x2d.astype(compute_dtype)
        w1v = w1v.astype(compute_dtype)
        w1g = w1g.astype(compute_dtype)
        w2c = w2.astype(compute_dtype)

    grid = (padded // tm_eff,)

    # Explicit VMEM budget: weights (worst case double-buffered) + pipelined
    # x/out tiles + f32 intermediates, with 2x headroom, clamped to 64 MiB so
    # it is valid on v7x as well as v5e/v6e.
    w_itm = jnp.dtype(w2c.dtype).itemsize
    x_itm = jnp.dtype(x2d.dtype).itemsize
    o_itm = jnp.dtype(x.dtype).itemsize
    w_bytes = (2 * C_in * half + half * C_out) * w_itm
    b_bytes = (2 * half + C_out) * jnp.dtype(b1.dtype).itemsize
    tile_in = 2 * tm_eff * C_in * x_itm
    tile_out = 2 * tm_eff * C_out * o_itm
    inter = tm_eff * (2 * half + C_out) * 4  # f32 v, g, y
    need = 2 * (w_bytes + b_bytes) + tile_in + tile_out + inter
    vmem_limit = int(min(max(2 * need, 32 << 20), 64 << 20))

    def _run(weight_pipeline_mode):
        kw = {} if weight_pipeline_mode is None else dict(pipeline_mode=weight_pipeline_mode)
        in_specs = [
            pl.BlockSpec((tm_eff, C_in), lambda i: (i, 0)),          # x tile (pipelined)
            pl.BlockSpec((C_in, half), lambda i: (0, 0), **kw),       # W1 value (resident)
            pl.BlockSpec((C_in, half), lambda i: (0, 0), **kw),       # W1 gate  (resident)
            pl.BlockSpec((1, half), lambda i: (0, 0), **kw),          # b1 value
            pl.BlockSpec((1, half), lambda i: (0, 0), **kw),          # b1 gate
            pl.BlockSpec((half, C_out), lambda i: (0, 0), **kw),      # W2 (resident)
            pl.BlockSpec((1, C_out), lambda i: (0, 0), **kw),         # b2
        ]
        return pl.pallas_call(
            _glu_mlp_kernel,
            out_shape=jax.ShapeDtypeStruct((padded, C_out), x.dtype),
            grid_spec=pltpu.PrefetchScalarGridSpec(
                num_scalar_prefetch=0,
                grid=grid,
                in_specs=in_specs,
                out_specs=pl.BlockSpec((tm_eff, C_out), lambda i: (i, 0)),
            ),
            compiler_params=pltpu.CompilerParams(
                dimension_semantics=("parallel",),  # token tiles shard across TCs (v7x)
                vmem_limit_bytes=vmem_limit,
            ),
        )(x2d, w1v, w1g, b1v, b1g, w2c, b2_2d)

    try:
        # Grid-invariant weights: ask for single buffering to halve weight VMEM.
        out2d = _run(pl.Buffered(1))
    except Exception:
        # Fallback for JAX versions where Buffered(1) on pallas_call is rejected.
        out2d = _run(None)

    out2d = out2d[:tokens]
    return out2d.reshape(B, N, C_out)


def init_glu_mlp_params(key, in_features, hidden_features, out_features,
                        dtype=jnp.float32):
    """nn.Linear-style uniform init; weights stored transposed (in, out)."""
    assert hidden_features % 2 == 0
    k1, k2, k3, k4 = jax.random.split(key, 4)
    bound1 = 1.0 / math.sqrt(in_features)
    bound2 = 1.0 / math.sqrt(hidden_features // 2)
    w1 = jax.random.uniform(k1, (in_features, hidden_features), dtype, -bound1, bound1)
    b1 = jax.random.uniform(k2, (hidden_features,), dtype, -bound1, bound1)
    w2 = jax.random.uniform(k3, (hidden_features // 2, out_features), dtype, -bound2, bound2)
    b2 = jax.random.uniform(k4, (out_features,), dtype, -bound2, bound2)
    return w1, b1, w2, b2


def glu_mlp_reference(x, w1, b1, w2, b2):
    """Pure-JAX reference matching the PyTorch GluMlp forward (drop=0)."""
    h = x @ w1 + b1
    half = h.shape[-1] // 2
    v, gates = h[..., :half], h[..., half:]
    g = v * jax.nn.sigmoid(gates)
    return g @ w2 + b2


if __name__ == "__main__":
    key = jax.random.PRNGKey(0)
    kx, kp, kx2 = jax.random.split(key, 3)

    B, N = 2, 8                  # 16 tokens
    in_features = 32
    hidden_features = 64         # even, as required by GluMlp
    out_features = 32

    x = jax.random.normal(kx, (B, N, in_features), jnp.float32)
    w1, b1, w2, b2 = init_glu_mlp_params(kp, in_features, hidden_features, out_features)

    y = glu_mlp_pallas(x, w1, b1, w2, b2)
    y = jax.block_until_ready(y)
    y_ref = glu_mlp_reference(x, w1, b1, w2, b2)
    assert y.shape == (B, N, out_features)
    assert jnp.allclose(y, y_ref, atol=1e-5, rtol=1e-5), "mismatch vs reference"

    # Non-divisible token count (exercises the cdiv/padding path, e.g. ViT's 197).
    x_odd = jax.random.normal(kx2, (1, 13, in_features), jnp.float32)
    y_odd = jax.block_until_ready(glu_mlp_pallas(x_odd, w1, b1, w2, b2))
    y_odd_ref = glu_mlp_reference(x_odd, w1, b1, w2, b2)
    assert y_odd.shape == (1, 13, out_features)
    assert jnp.allclose(y_odd, y_odd_ref, atol=1e-5, rtol=1e-5), "padded-path mismatch"

    print("KERNEL_OK")
</pallas_src>

<mosaic_0001>
module attributes {stable_mosaic.version = 11 : i64} {
  func.func @_glu_mlp_kernel(%arg0: i32, %arg1: memref<16x32xf32, #tpu.memory_space<vmem>>, %arg2: memref<32x32xf32, #tpu.memory_space<vmem>>, %arg3: memref<32x32xf32, #tpu.memory_space<vmem>>, %arg4: memref<1x32xf32, #tpu.memory_space<vmem>>, %arg5: memref<1x32xf32, #tpu.memory_space<vmem>>, %arg6: memref<32x32xf32, #tpu.memory_space<vmem>>, %arg7: memref<1x32xf32, #tpu.memory_space<vmem>>, %arg8: memref<16x32xf32, #tpu.memory_space<vmem>>) attributes {dimension_semantics = [#tpu.dimension_semantics<parallel>], iteration_bounds = array<i64: 1>, scalar_prefetch = 0 : i64, scratch_operands = 0 : i64, tpu.core_type = #tpu.core_type<tc>, window_params = [{transform_indices = @transform_0, window_bounds = array<i64: 16, 32>}, {pipeline_mode = #tpu.pipeline_mode<synchronous>, transform_indices = @transform_1, window_bounds = array<i64: 32, 32>}, {pipeline_mode = #tpu.pipeline_mode<synchronous>, transform_indices = @transform_2, window_bounds = array<i64: 32, 32>}, {pipeline_mode = #tpu.pipeline_mode<synchronous>, transform_indices = @transform_3, window_bounds = array<i64: 1, 32>}, {pipeline_mode = #tpu.pipeline_mode<synchronous>, transform_indices = @transform_4, window_bounds = array<i64: 1, 32>}, {pipeline_mode = #tpu.pipeline_mode<synchronous>, transform_indices = @transform_5, window_bounds = array<i64: 32, 32>}, {pipeline_mode = #tpu.pipeline_mode<synchronous>, transform_indices = @transform_6, window_bounds = array<i64: 1, 32>}, {transform_indices = @transform_7, window_bounds = array<i64: 16, 32>}]} {
    %c0 = arith.constant 0 : index
    %c0_0 = arith.constant 0 : index
    %0 = vector.load %arg1[%c0, %c0_0] : memref<16x32xf32, #tpu.memory_space<vmem>>, vector<16x32xf32>
    %c0_1 = arith.constant 0 : index
    %c0_2 = arith.constant 0 : index
    %1 = vector.load %arg2[%c0_1, %c0_2] : memref<32x32xf32, #tpu.memory_space<vmem>>, vector<32x32xf32>
    %cst = arith.constant dense<0.000000e+00> : vector<16x32xf32>
    %2 = tpu.matmul %0, %1, %cst {dimension_numbers = #tpu.dot_dimension_numbers<[1], [0], [0], [1], [0, 0, 1, 1], [], []>} : vector<16x32xf32>, vector<32x32xf32>, vector<16x32xf32> -> vector<16x32xf32>
    %c0_3 = arith.constant 0 : index
    %c0_4 = arith.constant 0 : index
    %3 = vector.load %arg4[%c0_3, %c0_4] : memref<1x32xf32, #tpu.memory_space<vmem>>, vector<1x32xf32>
    %4 = vector.broadcast %3 : vector<1x32xf32> to vector<16x32xf32>
    %5 = arith.addf %2, %4 : vector<16x32xf32>
    %c0_5 = arith.constant 0 : index
    %c0_6 = arith.constant 0 : index
    %6 = vector.load %arg3[%c0_5, %c0_6] : memref<32x32xf32, #tpu.memory_space<vmem>>, vector<32x32xf32>
    %cst_7 = arith.constant dense<0.000000e+00> : vector<16x32xf32>
    %7 = tpu.matmul %0, %6, %cst_7 {dimension_numbers = #tpu.dot_dimension_numbers<[1], [0], [0], [1], [0, 0, 1, 1], [], []>} : vector<16x32xf32>, vector<32x32xf32>, vector<16x32xf32> -> vector<16x32xf32>
    %c0_8 = arith.constant 0 : index
    %c0_9 = arith.constant 0 : index
    %8 = vector.load %arg5[%c0_8, %c0_9] : memref<1x32xf32, #tpu.memory_space<vmem>>, vector<1x32xf32>
    %9 = vector.broadcast %8 : vector<1x32xf32> to vector<16x32xf32>
    %10 = arith.addf %7, %9 : vector<16x32xf32>
    %11 = arith.negf %10 : vector<16x32xf32>
    %12 = math.exp %11 : vector<16x32xf32>
    %cst_10 = arith.constant 1.000000e+00 : f32
    %13 = vector.broadcast %cst_10 : f32 to vector<16x32xf32>
    %14 = arith.addf %13, %12 : vector<16x32xf32>
    %15 = arith.divf %13, %14 : vector<16x32xf32>
    %16 = arith.mulf %5, %15 : vector<16x32xf32>
    %c0_11 = arith.constant 0 : index
    %c0_12 = arith.constant 0 : index
    %17 = vector.load %arg6[%c0_11, %c0_12] : memref<32x32xf32, #tpu.memory_space<vmem>>, vector<32x32xf32>
    %cst_13 = arith.constant dense<0.000000e+00> : vector<16x32xf32>
    %18 = tpu.matmul %16, %17, %cst_13 {dimension_numbers = #tpu.dot_dimension_numbers<[1], [0], [0], [1], [0, 0, 1, 1], [], []>} : vector<16x32xf32>, vector<32x32xf32>, vector<16x32xf32> -> vector<16x32xf32>
    %c0_14 = arith.constant 0 : index
    %c0_15 = arith.constant 0 : index
    %19 = vector.load %arg7[%c0_14, %c0_15] : memref<1x32xf32, #tpu.memory_space<vmem>>, vector<1x32xf32>
    %20 = vector.broadcast %19 : vector<1x32xf32> to vector<16x32xf32>
    %21 = arith.addf %18, %20 : vector<16x32xf32>
    %c0_16 = arith.constant 0 : index
    %c0_17 = arith.constant 0 : index
    %22 = vector.load %arg8[%c0_16, %c0_17] : memref<16x32xf32, #tpu.memory_space<vmem>>, vector<16x32xf32>
    tpu.vector_store %arg8[%c0_16, %c0_17], %21 {strides = array<i32>} : memref<16x32xf32, #tpu.memory_space<vmem>>, vector<16x32xf32>,
    return
  }
  func.func @transform_0(%arg0: i32) -> (i32, i32) {
    %c0_i32 = arith.constant 0 : i32
    %c0_i32_0 = arith.constant 0 : i32
    return %arg0, %c0_i32 : i32, i32
  }
  func.func @transform_1(%arg0: i32) -> (i32, i32) {
    %c0_i32 = arith.constant 0 : i32
    %c0_i32_0 = arith.constant 0 : i32
    %c0_i32_1 = arith.constant 0 : i32
    return %c0_i32, %c0_i32_0 : i32, i32
  }
  func.func @transform_2(%arg0: i32) -> (i32, i32) {
    %c0_i32 = arith.constant 0 : i32
    %c0_i32_0 = arith.constant 0 : i32
    %c0_i32_1 = arith.constant 0 : i32
    return %c0_i32, %c0_i32_0 : i32, i32
  }
  func.func @transform_3(%arg0: i32) -> (i32, i32) {
    %c0_i32 = arith.constant 0 : i32
    %c0_i32_0 = arith.constant 0 : i32
    %c0_i32_1 = arith.constant 0 : i32
    return %c0_i32, %c0_i32_0 : i32, i32
  }
  func.func @transform_4(%arg0: i32) -> (i32, i32) {
    %c0_i32 = arith.constant 0 : i32
    %c0_i32_0 = arith.constant 0 : i32
    %c0_i32_1 = arith.constant 0 : i32
    return %c0_i32, %c0_i32_0 : i32, i32
  }
  func.func @transform_5(%arg0: i32) -> (i32, i32) {
    %c0_i32 = arith.constant 0 : i32
    %c0_i32_0 = arith.constant 0 : i32
    %c0_i32_1 = arith.constant 0 : i32
    return %c0_i32, %c0_i32_0 : i32, i32
  }
  func.func @transform_6(%arg0: i32) -> (i32, i32) {
    %c0_i32 = arith.constant 0 : i32
    %c0_i32_0 = arith.constant 0 : i32
    %c0_i32_1 = arith.constant 0 : i32
    return %c0_i32, %c0_i32_0 : i32, i32
  }
  func.func @transform_7(%arg0: i32) -> (i32, i32) {
    %c0_i32 = arith.constant 0 : i32
    %c0_i32_0 = arith.constant 0 : i32
    return %arg0, %c0_i32 : i32, i32
  }
}

module attributes {stable_mosaic.version = 11 : i64} {
  func.func @_glu_mlp_kernel(%arg0: i32, %arg1: memref<16x32xf32, #tpu.memory_space<vmem>>, %arg2: memref<32x32xf32, #tpu.memory_space<vmem>>, %arg3: memref<32x32xf32, #tpu.memory_space<vmem>>, %arg4: memref<1x32xf32, #tpu.memory_space<vmem>>, %arg5: memref<1x32xf32, #tpu.memory_space<vmem>>, %arg6: memref<32x32xf32, #tpu.memory_space<vmem>>, %arg7: memref<1x32xf32, #tpu.memory_space<vmem>>, %arg8: memref<16x32xf32, #tpu.memory_space<vmem>>) attributes {dimension_semantics = [#tpu.dimension_semantics<parallel>], iteration_bounds = array<i64: 1>, scalar_prefetch = 0 : i64, scratch_operands = 0 : i64, tpu.core_type = #tpu.core_type<tc>, window_params = [{transform_indices = @transform_0, window_bounds = array<i64: 16, 32>}, {pipeline_mode = #tpu.pipeline_mode<synchronous>, transform_indices = @transform_1, window_bounds = array<i64: 32, 32>}, {pipeline_mode = #tpu.pipeline_mode<synchronous>, transform_indices = @transform_2, window_bounds = array<i64: 32, 32>}, {pipeline_mode = #tpu.pipeline_mode<synchronous>, transform_indices = @transform_3, window_bounds = array<i64: 1, 32>}, {pipeline_mode = #tpu.pipeline_mode<synchronous>, transform_indices = @transform_4, window_bounds = array<i64: 1, 32>}, {pipeline_mode = #tpu.pipeline_mode<synchronous>, transform_indices = @transform_5, window_bounds = array<i64: 32, 32>}, {pipeline_mode = #tpu.pipeline_mode<synchronous>, transform_indices = @transform_6, window_bounds = array<i64: 1, 32>}, {transform_indices = @transform_7, window_bounds = array<i64: 16, 32>}]} {
    %c0 = arith.constant 0 : index
    %c0_0 = arith.constant 0 : index
    %0 = vector.load %arg1[%c0, %c0_0] : memref<16x32xf32, #tpu.memory_space<vmem>>, vector<16x32xf32>
    %c0_1 = arith.constant 0 : index
    %c0_2 = arith.constant 0 : index
    %1 = vector.load %arg2[%c0_1, %c0_2] : memref<32x32xf32, #tpu.memory_space<vmem>>, vector<32x32xf32>
    %cst = arith.constant dense<0.000000e+00> : vector<16x32xf32>
    %2 = tpu.matmul %0, %1, %cst {dimension_numbers = #tpu.dot_dimension_numbers<[1], [0], [0], [1], [0, 0, 1, 1], [], []>} : vector<16x32xf32>, vector<32x32xf32>, vector<16x32xf32> -> vector<16x32xf32>
    %c0_3 = arith.constant 0 : index
    %c0_4 = arith.constant 0 : index
    %3 = vector.load %arg4[%c0_3, %c0_4] : memref<1x32xf32, #tpu.memory_space<vmem>>, vector<1x32xf32>
    %4 = vector.broadcast %3 : vector<1x32xf32> to vector<16x32xf32>
    %5 = arith.addf %2, %4 : vector<16x32xf32>
    %c0_5 = arith.constant 0 : index
    %c0_6 = arith.constant 0 : index
    %6 = vector.load %arg3[%c0_5, %c0_6] : memref<32x32xf32, #tpu.memory_space<vmem>>, vector<32x32xf32>
    %cst_7 = arith.constant dense<0.000000e+00> : vector<16x32xf32>
    %7 = tpu.matmul %0, %6, %cst_7 {dimension_numbers = #tpu.dot_dimension_numbers<[1], [0], [0], [1], [0, 0, 1, 1], [], []>} : vector<16x32xf32>, vector<32x32xf32>, vector<16x32xf32> -> vector<16x32xf32>
    %c0_8 = arith.constant 0 : index
    %c0_9 = arith.constant 0 : index
    %8 = vector.load %arg5[%c0_8, %c0_9] : memref<1x32xf32, #tpu.memory_space<vmem>>, vector<1x32xf32>
    %9 = vector.broadcast %8 : vector<1x32xf32> to vector<16x32xf32>
    %10 = arith.addf %7, %9 : vector<16x32xf32>
    %11 = arith.negf %10 : vector<16x32xf32>
    %12 = math.exp %11 : vector<16x32xf32>
    %cst_10 = arith.constant 1.000000e+00 : f32
    %13 = vector.broadcast %cst_10 : f32 to vector<16x32xf32>
    %14 = arith.addf %13, %12 : vector<16x32xf32>
    %15 = arith.divf %13, %14 : vector<16x32xf32>
    %16 = arith.mulf %5, %15 : vector<16x32xf32>
    %c0_11 = arith.constant 0 : index
    %c0_12 = arith.constant 0 : index
    %17 = vector.load %arg6[%c0_11, %c0_12] : memref<32x32xf32, #tpu.memory_space<vmem>>, vector<32x32xf32>
    %cst_13 = arith.constant dense<0.000000e+00> : vector<16x32xf32>
    %18 = tpu.matmul %16, %17, %cst_13 {dimension_numbers = #tpu.dot_dimension_numbers<[1], [0], [0], [1], [0, 0, 1, 1], [], []>} : vector<16x32xf32>, vector<32x32xf32>, vector<16x32xf32> -> vector<16x32xf32>
    %c0_14 = arith.constant 0 : index
    %c0_15 = arith.constant 0 : index
    %19 = vector.load %arg7[%c0_14, %c0_15] : memref<1x32xf32, #tpu.memory_space<vmem>>, vector<1x32xf32>
    %20 = vector.broadcast %19 : vector<1x32xf32> to vector<16x32xf32>
    %21 = arith.addf %18, %20 : vector<16x32xf32>
    %c0_16 = arith.constant 0 : index
    %c0_17 = arith.constant 0 : index
    %22 = vector.load %arg8[%c0_16, %c0_17] : memref<16x32xf32, #tpu.memory_space<vmem>>, vector<16x32xf32>
    tpu.vector_store %arg8[%c0_16, %c0_17], %21 {strides = array<i32>} : memref<16x32xf32, #tpu.memory_space<vmem>>, vector<16x32xf32>,
    return
  }
  func.func @transform_0(%arg0: i32) -> (i32, i32) {
    %c0_i32 = arith.constant 0 : i32
    %c0_i32_0 = arith.constant 0 : i32
    return %arg0, %c0_i32 : i32, i32
  }
  func.func @transform_1(%arg0: i32) -> (i32, i32) {
    %c0_i32 = arith.constant 0 : i32
    %c0_i32_0 = arith.constant 0 : i32
    %c0_i32_1 = arith.constant 0 : i32
    return %c0_i32, %c0_i32_0 : i32, i32
  }
  func.func @transform_2(%arg0: i32) -> (i32, i32) {
    %c0_i32 = arith.constant 0 : i32
    %c0_i32_0 = arith.constant 0 : i32
    %c0_i32_1 = arith.constant 0 : i32
    return %c0_i32, %c0_i32_0 : i32, i32
  }
  func.func @transform_3(%arg0: i32) -> (i32, i32) {
    %c0_i32 = arith.constant 0 : i32
    %c0_i32_0 = arith.constant 0 : i32
    %c0_i32_1 = arith.constant 0 : i32
    return %c0_i32, %c0_i32_0 : i32, i32
  }
  func.func @transform_4(%arg0: i32) -> (i32, i32) {
    %c0_i32 = arith.constant 0 : i32
    %c0_i32_0 = arith.constant 0 : i32
    %c0_i32_1 = arith.constant 0 : i32
    return %c0_i32, %c0_i32_0 : i32, i32
  }
  func.func @transform_5(%arg0: i32) -> (i32, i32) {
    %c0_i32 = arith.constant 0 : i32
    %c0_i32_0 = arith.constant 0 : i32
    %c0_i32_1 = arith.constant 0 : i32
    return %c0_i32, %c0_i32_0 : i32, i32
  }
  func.func @transform_6(%arg0: i32) -> (i32, i32) {
    %c0_i32 = arith.constant 0 : i32
    %c0_i32_0 = arith.constant 0 : i32
    %c0_i32_1 = arith.constant 0 : i32
    return %c0_i32, %c0_i32_0 : i32, i32
  }
  func.func @transform_7(%arg0: i32) -> (i32, i32) {
    %c0_i32 = arith.constant 0 : i32
    %c0_i32_0 = arith.constant 0 : i32
    return %arg0, %c0_i32 : i32, i32
  }
}

</mosaic_0001>

<llo_original>
// kernel: tpu_custom_call.1
$region0: #{tpu_custom_call.1}
  #allocation0 [shape = 'u32[]', space=smem, size = 0x4, offset = 0x4, fixed_abs, tag = 'smem constant byte address 0x4 - core index']
  #allocation1 [shape = 'u32[144,128]{1,0:T(1,128)}', space=vmem, size = 0x12000, scoped, tag = 'internal scratch']
  %s0 = inlined_call_operand.hbm [shape: f32[16,32], index: 0, kind: input, shape index: {}]
  %s1 = inlined_call_operand.hbm [shape: f32[32,32], index: 1, kind: input, shape index: {}]
  %s2 = inlined_call_operand.hbm [shape: f32[32,32], index: 2, kind: input, shape index: {}]
  %s3 = inlined_call_operand.vmem [shape: f32[1,32], index: 3, kind: input, shape index: {}]
  %s4 = inlined_call_operand.vmem [shape: f32[1,32], index: 4, kind: input, shape index: {}]
  %s5 = inlined_call_operand.hbm [shape: f32[32,32], index: 5, kind: input, shape index: {}]
  %s6 = inlined_call_operand.vmem [shape: f32[1,32], index: 6, kind: input, shape index: {}]
  %s7 = inlined_call_operand.hbm [shape: f32[16,32], index: 7, kind: output, shape index: {}]
  %s8 = sld [smem:[#allocation0]]
  $region54: #{tpu_custom_call.1} parent=0
    _
  %s10 = ssub.s32 1, %s8
  %s11 = scalar_select 0, %s10, %s8
  $region1: #{tpu_custom_call.1} parent=0
    #allocation2 [shape = 'u8[8192]{0}', space=vmem, size = 0x2000, scoped, tag = 'input window, operand 0, single buffered']
    #allocation3 [shape = 's32[1]{0}', space=sflag, size = 0x4, scoped, tag = 'scoped memory for tpu_custom_call.1']
    #allocation4 [shape = 's32[1]{0}', space=sflag, size = 0x4, scoped, tag = 'scoped memory for tpu_custom_call.1']
    #allocation5 [shape = 'u8[16384]{0}', space=vmem, size = 0x4000, scoped, tag = 'input window, operand 1, single buffered']
    #allocation6 [shape = 's32[1]{0}', space=sflag, size = 0x4, scoped, tag = 'scoped memory for tpu_custom_call.1']
    #allocation7 [shape = 'u8[16384]{0}', space=vmem, size = 0x4000, scoped, tag = 'input window, operand 2, single buffered']
    #allocation8 [shape = 'u8[16384]{0}', space=vmem, size = 0x4000, scoped, tag = 'input window, operand 5, single buffered']
    #allocation9 [shape = 's32[1]{0}', space=sflag, size = 0x4, scoped, tag = 'scoped memory for tpu_custom_call.1']
    #allocation10 [shape = 'u8[8192]{0}', space=vmem, size = 0x2000, scoped, tag = 'output window, operand 0, single buffered']
    %12 = vsyncpa [#allocation3], 0
    %13 = vsyncpa [#allocation6], 0
    %14 = vsyncpa [#allocation9], 0
    %15 = vsyncpa [#allocation4], 0
    // Predicated region
    $region2: #{tpu_custom_call.1} parent=1 // pred_check
      _
    $region3: #{tpu_custom_call.1} parent=1 // pred_check_branch
      %17 = sbr.rel (0) target = $region5
    $region4: #{tpu_custom_call.1} parent=1 // pred_region
      %s19 = ssub.s32 256, 256
      %20 = vsyncadd [#allocation3], %s19
      %s21 = sshll.u32 [#allocation2], 4
      %s22 = int_to_ptr.vmem [resolvable:$true] %s21
      %27 = dma.hbm_to_vmem [thread:$0]  %s0, 256, %s22, [#allocation3], 128, 128, 8
    $region5: #{tpu_custom_call.1} parent=1 // pred_fallthru
      _
    // Predicated region
    $region6: #{tpu_custom_call.1} parent=1 // pred_check
      _
    $region7: #{tpu_custom_call.1} parent=1 // pred_check_branch
      %29 = sbr.rel (0) target = $region9
    $region8: #{tpu_custom_call.1} parent=1 // pred_region
      %s31 = ssub.s32 512, 512
      %32 = vsyncadd [#allocation6], %s31
      %s33 = sshll.u32 [#allocation5], 4
      %s34 = int_to_ptr.vmem [resolvable:$true] %s33
      %39 = dma.hbm_to_vmem [thread:$0]  %s1, 512, %s34, [#allocation6], 128, 128, 8
    $region9: #{tpu_custom_call.1} parent=1 // pred_fallthru
      _
    // Predicated region
    $region10: #{tpu_custom_call.1} parent=1 // pred_check
      _
    $region11: #{tpu_custom_call.1} parent=1 // pred_check_branch
      %41 = sbr.rel (0) target = $region13
    $region12: #{tpu_custom_call.1} parent=1 // pred_region
      %s43 = ssub.s32 512, 512
      %44 = vsyncadd [#allocation6], %s43
      %s45 = sshll.u32 [#allocation7], 4
      %s46 = int_to_ptr.vmem [resolvable:$true] %s45
      %51 = dma.hbm_to_vmem [thread:$0]  %s2, 512, %s46, [#allocation6], 128, 128, 8
    $region13: #{tpu_custom_call.1} parent=1 // pred_fallthru
      _
    // Predicated region
    $region14: #{tpu_custom_call.1} parent=1 // pred_check
      _
    $region15: #{tpu_custom_call.1} parent=1 // pred_check_branch
      %53 = sbr.rel (0) target = $region17
    $region16: #{tpu_custom_call.1} parent=1 // pred_region
      _
    $region17: #{tpu_custom_call.1} parent=1 // pred_fallthru
      _
    // Predicated region
    $region18: #{tpu_custom_call.1} parent=1 // pred_check
      _
    $region19: #{tpu_custom_call.1} parent=1 // pred_check_branch
      %55 = sbr.rel (0) target = $region21
    $region20: #{tpu_custom_call.1} parent=1 // pred_region
      _
    $region21: #{tpu_custom_call.1} parent=1 // pred_fallthru
      _
    // Predicated region
    $region22: #{tpu_custom_call.1} parent=1 // pred_check
      _
    $region23: #{tpu_custom_call.1} parent=1 // pred_check_branch
      %57 = sbr.rel (0) target = $region25
    $region24: #{tpu_custom_call.1} parent=1 // pred_region
      %s59 = ssub.s32 512, 512
      %60 = vsyncadd [#allocation9], %s59
      %s61 = sshll.u32 [#allocation8], 4
      %s62 = int_to_ptr.vmem [resolvable:$true] %s61
      %67 = dma.hbm_to_vmem [thread:$0]  %s5, 512, %s62, [#allocation9], 128, 128, 8
    $region25: #{tpu_custom_call.1} parent=1 // pred_fallthru
      _
    // Predicated region
    $region26: #{tpu_custom_call.1} parent=1 // pred_check
      _
    $region27: #{tpu_custom_call.1} parent=1 // pred_check_branch
      %69 = sbr.rel (0) target = $region29
    $region28: #{tpu_custom_call.1} parent=1 // pred_region
      _
    $region29: #{tpu_custom_call.1} parent=1 // pred_fallthru
      _
    // Predicated region
    $region30: #{tpu_custom_call.1} parent=1 // pred_check
      _
    $region31: #{tpu_custom_call.1} parent=1 // pred_check_branch
      %71 = sbr.rel (0) target = $region33
    $region32: #{tpu_custom_call.1} parent=1 // pred_region
      %72 = dma.done [#allocation3], 256
    $region33: #{tpu_custom_call.1} parent=1 // pred_fallthru
      _
    // Predicated region
    $region34: #{tpu_custom_call.1} parent=1 // pred_check
      _
    $region35: #{tpu_custom_call.1} parent=1 // pred_check_branch
      %74 = sbr.rel (0) target = $region37
    $region36: #{tpu_custom_call.1} parent=1 // pred_region
      %75 = dma.done [#allocation6], 512
    $region37: #{tpu_custom_call.1} parent=1 // pred_fallthru
      _
    // Predicated region
    $region38: #{tpu_custom_call.1} parent=1 // pred_check
      _
    $region39: #{tpu_custom_call.1} parent=1 // pred_check_branch
      %77 = sbr.rel (0) target = $region41
    $region40: #{tpu_custom_call.1} parent=1 // pred_region
      %78 = dma.done [#allocation6], 512
    $region41: #{tpu_custom_call.1} parent=1 // pred_fallthru
      _
    // Predicated region
    $region42: #{tpu_custom_call.1} parent=1 // pred_check
      _
    $region43: #{tpu_custom_call.1} parent=1 // pred_check_branch
      %80 = sbr.rel (0) target = $region45
    $region44: #{tpu_custom_call.1} parent=1 // pred_region
      %81 = dma.done [#allocation9], 512
    $region45: #{tpu_custom_call.1} parent=1 // pred_fallthru
      _
    %v82 = vld [vmem:[#allocation2] sm:$0xff]
    %v83 = vld [vmem:[#allocation2 + $0x8] sm:$0xff]
    %v84 = vld [vmem:[#allocation5] sm:$0xff]
    %v85 = vld [vmem:[#allocation5 + $0x8] sm:$0xff]
    %v86 = vld [vmem:[#allocation5 + $0x10] sm:$0xff]
    %v87 = vld [vmem:[#allocation5 + $0x18] sm:$0xff]
    %v88 = vld [vmem:[%s3] sm:$0x1]
    %v90 = vlaneseq
    %v91 = vshrl.u32 %v90, 7
    %v92 = vsub.s32 0, %v91
    %v93 = vrot.slane %v88, %v92
    %vm95 = vcmask 261120
    %v97 = vsel %vm95, %v82, 0
    %v100 = vsel %vm95, %v83, 0
    %102 = vmatprep.subr.mxu0 0.0
    %103 = vmatpush1.msra.mxu0 %v84
    %104 = vmatprep.subr.mxu0 0.0
    %105 = vmatpush1.msra.mxu0 %v85
    %106 = vmatprep.subr.mxu0 0.0
    %107 = vmatpush1.msra.mxu0 %v86
    %108 = vmatprep.subr.mxu0 0.0
    %109 = vmatpush1.msra.mxu0 %v87
    %110 = vmatprep.subr.mxu0 0.0
    %111 = vmatpush1.msra.mxu0 0.0
    %112 = vmatprep.subr.mxu0 0.0
    %113 = vmatpush1.msra.mxu0 0.0
    %114 = vmatprep.subr.mxu0 0.0
    %115 = vmatpush1.msra.mxu0 0.0
    %116 = vmatprep.subr.mxu0 0.0
    %117 = vmatpush1.msra.mxu0 0.0
    %118 = vmatprep.subr.mxu0 0.0
    %119 = vmatpush1.msra.mxu0 0.0
    %120 = vmatprep.subr.mxu0 0.0
    %121 = vmatpush1.msra.mxu0 0.0
    %122 = vmatprep.subr.mxu0 0.0
    %123 = vmatpush1.msra.mxu0 0.0
    %124 = vmatprep.subr.mxu0 0.0
    %125 = vmatpush1.msra.mxu0 0.0
    %126 = vmatprep.subr.mxu0 0.0
    %127 = vmatpush1.msra.mxu0 0.0
    %128 = vmatprep.subr.mxu0 0.0
    %129 = vmatpush1.msra.mxu0 0.0
    %130 = vmatprep.subr.mxu0 0.0
    %131 = vmatpush1.msra.mxu0 0.0
    %132 = vmatprep.subr.mxu0 0.0
    %133 = vmatpush1.msra.mxu0 0.0
    %134 = vmatprep.subr.mxu0 0.0
    %135 = vmatpush1.msra.mxu0 0.0
    %136 = vmatprep.subr.mxu0 0.0
    %137 = vmatpush1.msra.mxu0 0.0
    %138 = vmatprep.subr.mxu0 0.0
    %139 = vmatpush1.msra.mxu0 0.0
    %140 = vmatprep.subr.mxu0 0.0
    %141 = vmatpush1.msra.mxu0 0.0
    %142 = vmatprep.subr.mxu0 0.0
    %143 = vmatpush1.msra.mxu0 0.0
    %144 = vmatprep.subr.mxu0 0.0
    %145 = vmatpush1.msra.mxu0 0.0
    %146 = vmatprep.subr.mxu0 0.0
    %147 = vmatpush1.msra.mxu0 0.0
    %148 = vmatprep.subr.mxu0 0.0
    %149 = vmatpush1.msra.mxu0 0.0
    %150 = vmatprep.subr.mxu0 0.0
    %151 = vmatpush1.msra.mxu0 0.0
    %152 = vmatprep.subr.mxu0 0.0
    %153 = vmatpush1.msra.mxu0 0.0
    %154 = vmatprep.subr.mxu0 0.0
    %155 = vmatpush1.msra.mxu0 0.0
    %156 = vmatprep.subr.mxu0 0.0
    %157 = vmatpush1.msra.mxu0 0.0
    %158 = vmatprep.subr.mxu0 0.0
    %159 = vmatpush1.msra.mxu0 0.0
    %160 = vmatprep.subr.mxu0 0.0
    %161 = vmatpush1.msra.mxu0 0.0
    %162 = vmatprep.subr.mxu0 0.0
    %163 = vmatpush1.msra.mxu0 0.0
    %164 = vmatprep.subr.mxu0 0.0
    %165 = vmatpush1.msra.mxu0 0.0
    %166 = vmatprep.mubr.f32.mxu0 0.0
    %167 = vmatmul.mubr.f32.gmra.mrb[0].mxu0 %v97
    %v168 = vpop.f32.mrb[0].mxu0
    %v169 = vadd.f32 %v93, %v168
    %v170 = vpop.f32.mrb[0].mxu0
    %171 = vmatprep.mubr.f32.mxu0 0.0
    %172 = vmatmul.mubr.f32.gmra.mrb[0].mxu0 %v100
    %v173 = vpop.f32.mrb[0].mxu0
    %v174 = vadd.f32 %v93, %v173
    %v175 = vpop.f32.mrb[0].mxu0
    %176 = vdwg.mxu0
    %v177 = vld [vmem:[#allocation7] sm:$0xff]
    %v178 = vld [vmem:[#allocation7 + $0x8] sm:$0xff]
    %v179 = vld [vmem:[#allocation7 + $0x10] sm:$0xff]
    %v180 = vld [vmem:[#allocation7 + $0x18] sm:$0xff]
    %v181 = vld [vmem:[%s4] sm:$0x1]
    %v183 = vlaneseq
    %v184 = vshrl.u32 %v183, 7
    %v185 = vsub.s32 0, %v184
    %v186 = vrot.slane %v181, %v185
    %188 = vmatprep.subr.mxu0 0.0
    %189 = vmatpush1.msra.mxu0 %v177
    %190 = vmatprep.subr.mxu0 0.0
    %191 = vmatpush1.msra.mxu0 %v178
    %192 = vmatprep.subr.mxu0 0.0
    %193 = vmatpush1.msra.mxu0 %v179
    %194 = vmatprep.subr.mxu0 0.0
    %195 = vmatpush1.msra.mxu0 %v180
    %196 = vmatprep.subr.mxu0 0.0
    %197 = vmatpush1.msra.mxu0 0.0
    %198 = vmatprep.subr.mxu0 0.0
    %199 = vmatpush1.msra.mxu0 0.0
    %200 = vmatprep.subr.mxu0 0.0
    %201 = vmatpush1.msra.mxu0 0.0
    %202 = vmatprep.subr.mxu0 0.0
    %203 = vmatpush1.msra.mxu0 0.0
    %204 = vmatprep.subr.mxu0 0.0
    %205 = vmatpush1.msra.mxu0 0.0
    %206 = vmatprep.subr.mxu0 0.0
    %207 = vmatpush1.msra.mxu0 0.0
    %208 = vmatprep.subr.mxu0 0.0
    %209 = vmatpush1.msra.mxu0 0.0
    %210 = vmatprep.subr.mxu0 0.0
    %211 = vmatpush1.msra.mxu0 0.0
    %212 = vmatprep.subr.mxu0 0.0
    %213 = vmatpush1.msra.mxu0 0.0
    %214 = vmatprep.subr.mxu0 0.0
    %215 = vmatpush1.msra.mxu0 0.0
    %216 = vmatprep.subr.mxu0 0.0
    %217 = vmatpush1.msra.mxu0 0.0
    %218 = vmatprep.subr.mxu0 0.0
    %219 = vmatpush1.msra.mxu0 0.0
    %220 = vmatprep.subr.mxu0 0.0
    %221 = vmatpush1.msra.mxu0 0.0
    %222 = vmatprep.subr.mxu0 0.0
    %223 = vmatpush1.msra.mxu0 0.0
    %224 = vmatprep.subr.mxu0 0.0
    %225 = vmatpush1.msra.mxu0 0.0
    %226 = vmatprep.subr.mxu0 0.0
    %227 = vmatpush1.msra.mxu0 0.0
    %228 = vmatprep.subr.mxu0 0.0
    %229 = vmatpush1.msra.mxu0 0.0
    %230 = vmatprep.subr.mxu0 0.0
    %231 = vmatpush1.msra.mxu0 0.0
    %232 = vmatprep.subr.mxu0 0.0
    %233 = vmatpush1.msra.mxu0 0.0
    %234 = vmatprep.subr.mxu0 0.0
    %235 = vmatpush1.msra.mxu0 0.0
    %236 = vmatprep.subr.mxu0 0.0
    %237 = vmatpush1.msra.mxu0 0.0
    %238 = vmatprep.subr.mxu0 0.0
    %239 = vmatpush1.msra.mxu0 0.0
    %240 = vmatprep.subr.mxu0 0.0
    %241 = vmatpush1.msra.mxu0 0.0
    %242 = vmatprep.subr.mxu0 0.0
    %243 = vmatpush1.msra.mxu0 0.0
    %244 = vmatprep.subr.mxu0 0.0
    %245 = vmatpush1.msra.mxu0 0.0
    %246 = vmatprep.subr.mxu0 0.0
    %247 = vmatpush1.msra.mxu0 0.0
    %248 = vmatprep.subr.mxu0 0.0
    %249 = vmatpush1.msra.mxu0 0.0
    %250 = vmatprep.subr.mxu0 0.0
    %251 = vmatpush1.msra.mxu0 0.0
    %252 = vmatprep.mubr.f32.mxu0 0.0
    %253 = vmatmul.mubr.f32.gmra.mrb[0].mxu0 %v97
    %v254 = vpop.f32.mrb[0].mxu0
    %v255 = vadd.f32 %v186, %v254
    %v256 = vpop.f32.mrb[0].mxu0
    %257 = vmatprep.mubr.f32.mxu0 0.0
    %258 = vmatmul.mubr.f32.gmra.mrb[0].mxu0 %v100
    %v259 = vpop.f32.mrb[0].mxu0
    %v260 = vadd.f32 %v186, %v259
    %v261 = vpop.f32.mrb[0].mxu0
    %262 = vdwg.mxu0
    %v263 = vxor.u32 %v255, 2147483648
    %v264 = vxor.u32 %v260, 2147483648
    %v265 = vmul.f32 %v263, 1.442695
    %v266 = vpow.pop %v265
    %v267 = vmul.f32 %v264, 1.442695
    %v268 = vpow.pop %v267
    %v269 = vadd.f32 %v266, 1.0
    %v270 = vadd.f32 %v268, 1.0
    %v271 = vrcp.pop %v269
    %v272 = vmul.f32 1.0, %v271
    %v273 = vrcp.pop %v270
    %v274 = vmul.f32 1.0, %v273
    %v275 = vmul.f32 %v169, %v272
    %v276 = vmul.f32 %v174, %v274
    %v277 = vld [vmem:[#allocation8] sm:$0xff]
    %v278 = vld [vmem:[#allocation8 + $0x8] sm:$0xff]
    %v279 = vld [vmem:[#allocation8 + $0x10] sm:$0xff]
    %v280 = vld [vmem:[#allocation8 + $0x18] sm:$0xff]
    %v281 = vld [vmem:[%s6] sm:$0x1]
    %v283 = vlaneseq
    %v284 = vshrl.u32 %v283, 7
    %v285 = vsub.s32 0, %v284
    %v286 = vrot.slane %v281, %v285
    %v289 = vsel %vm95, %v275, 0
    %v292 = vsel %vm95, %v276, 0
    %294 = vmatprep.subr.mxu0 0.0
    %295 = vmatpush1.msra.mxu0 %v277
    %296 = vmatprep.subr.mxu0 0.0
    %297 = vmatpush1.msra.mxu0 %v278
    %298 = vmatprep.subr.mxu0 0.0
    %299 = vmatpush1.msra.mxu0 %v279
    %300 = vmatprep.subr.mxu0 0.0
    %301 = vmatpush1.msra.mxu0 %v280
    %302 = vmatprep.subr.mxu0 0.0
    %303 = vmatpush1.msra.mxu0 0.0
    %304 = vmatprep.subr.mxu0 0.0
    %305 = vmatpush1.msra.mxu0 0.0
    %306 = vmatprep.subr.mxu0 0.0
    %307 = vmatpush1.msra.mxu0 0.0
    %308 = vmatprep.subr.mxu0 0.0
    %309 = vmatpush1.msra.mxu0 0.0
    %310 = vmatprep.subr.mxu0 0.0
    %311 = vmatpush1.msra.mxu0 0.0
    %312 = vmatprep.subr.mxu0 0.0
    %313 = vmatpush1.msra.mxu0 0.0
    %314 = vmatprep.subr.mxu0 0.0
    %315 = vmatpush1.msra.mxu0 0.0
    %316 = vmatprep.subr.mxu0 0.0
    %317 = vmatpush1.msra.mxu0 0.0
    %318 = vmatprep.subr.mxu0 0.0
    %319 = vmatpush1.msra.mxu0 0.0
    %320 = vmatprep.subr.mxu0 0.0
    %321 = vmatpush1.msra.mxu0 0.0
    %322 = vmatprep.subr.mxu0 0.0
    %323 = vmatpush1.msra.mxu0 0.0
    %324 = vmatprep.subr.mxu0 0.0
    %325 = vmatpush1.msra.mxu0 0.0
    %326 = vmatprep.subr.mxu0 0.0
    %327 = vmatpush1.msra.mxu0 0.0
    %328 = vmatprep.subr.mxu0 0.0
    %329 = vmatpush1.msra.mxu0 0.0
    %330 = vmatprep.subr.mxu0 0.0
    %331 = vmatpush1.msra.mxu0 0.0
    %332 = vmatprep.subr.mxu0 0.0
    %333 = vmatpush1.msra.mxu0 0.0
    %334 = vmatprep.subr.mxu0 0.0
    %335 = vmatpush1.msra.mxu0 0.0
    %336 = vmatprep.subr.mxu0 0.0
    %337 = vmatpush1.msra.mxu0 0.0
    %338 = vmatprep.subr.mxu0 0.0
    %339 = vmatpush1.msra.mxu0 0.0
    %340 = vmatprep.subr.mxu0 0.0
    %341 = vmatpush1.msra.mxu0 0.0
    %342 = vmatprep.subr.mxu0 0.0
    %343 = vmatpush1.msra.mxu0 0.0
    %344 = vmatprep.subr.mxu0 0.0
    %345 = vmatpush1.msra.mxu0 0.0
    %346 = vmatprep.subr.mxu0 0.0
    %347 = vmatpush1.msra.mxu0 0.0
    %348 = vmatprep.subr.mxu0 0.0
    %349 = vmatpush1.msra.mxu0 0.0
    %350 = vmatprep.subr.mxu0 0.0
    %351 = vmatpush1.msra.mxu0 0.0
    %352 = vmatprep.subr.mxu0 0.0
    %353 = vmatpush1.msra.mxu0 0.0
    %354 = vmatprep.subr.mxu0 0.0
    %355 = vmatpush1.msra.mxu0 0.0
    %356 = vmatprep.subr.mxu0 0.0
    %357 = vmatpush1.msra.mxu0 0.0
    %358 = vmatprep.mubr.f32.mxu0 0.0
    %359 = vmatmul.mubr.f32.gmra.mrb[0].mxu0 %v289
    %v360 = vpop.f32.mrb[0].mxu0
    %v361 = vadd.f32 %v286, %v360
    %v362 = vpop.f32.mrb[0].mxu0
    %363 = vmatprep.mubr.f32.mxu0 0.0
    %364 = vmatmul.mubr.f32.gmra.mrb[0].mxu0 %v292
    %v365 = vpop.f32.mrb[0].mxu0
    %v366 = vadd.f32 %v286, %v365
    %v367 = vpop.f32.mrb[0].mxu0
    %368 = vdwg.mxu0
    %369 = vst.msk [vmem:[#allocation10] sm:$0xff] %vm95, %v361
    %370 = vst.msk [vmem:[#allocation10 + $0x8] sm:$0xff] %vm95, %v366
    // Predicated region
    $region46: #{tpu_custom_call.1} parent=1 // pred_check
      _
    $region47: #{tpu_custom_call.1} parent=1 // pred_check_branch
      %372 = sbr.rel (0) target = $region49
    $region48: #{tpu_custom_call.1} parent=1 // pred_region
      %s374 = ssub.s32 256, 256
      %375 = vsyncadd [#allocation4], %s374
      %s376 = sshll.u32 [#allocation10], 4
      %s377 = int_to_ptr.vmem [resolvable:$true] %s376
      %382 = dma.vmem_to_hbm [thread:$0]  %s377, 256, %s7, [#allocation4], 128, 128, 8
    $region49: #{tpu_custom_call.1} parent=1 // pred_fallthru
      _
    // Predicated region
    $region50: #{tpu_custom_call.1} parent=1 // pred_check
      _
    $region51: #{tpu_custom_call.1} parent=1 // pred_check_branch
      %384 = sbr.rel (0) target = $region53
    $region52: #{tpu_custom_call.1} parent=1 // pred_region
      %385 = dma.done [#allocation4], 256
    $region53: #{tpu_custom_call.1} parent=1 // pred_fallthru
      _
    %386 = vsyncpa [#allocation3], 1
    %387 = vsyncpa [#allocation6], 1
    %388 = vsyncpa [#allocation9], 1
    %389 = vsyncpa [#allocation4], 1

// kernel: tpu_custom_call.1
$region0: #{tpu_custom_call.1}
  #allocation0 [shape = 'u32[]', space=smem, size = 0x4, offset = 0x4, fixed_abs, tag = 'smem constant byte address 0x4 - core index']
  #allocation1 [shape = 'u32[144,128]{1,0:T(1,128)}', space=vmem, size = 0x12000, scoped, tag = 'internal scratch']
  %s0 = inlined_call_operand.hbm [shape: f32[16,32], index: 0, kind: input, shape index: {}]
  %s1 = inlined_call_operand.hbm [shape: f32[32,32], index: 1, kind: input, shape index: {}]
  %s2 = inlined_call_operand.hbm [shape: f32[32,32], index: 2, kind: input, shape index: {}]
  %s3 = inlined_call_operand.vmem [shape: f32[1,32], index: 3, kind: input, shape index: {}]
  %s4 = inlined_call_operand.vmem [shape: f32[1,32], index: 4, kind: input, shape index: {}]
  %s5 = inlined_call_operand.hbm [shape: f32[32,32], index: 5, kind: input, shape index: {}]
  %s6 = inlined_call_operand.vmem [shape: f32[1,32], index: 6, kind: input, shape index: {}]
  %s7 = inlined_call_operand.hbm [shape: f32[16,32], index: 7, kind: output, shape index: {}]
  %s8 = sld [smem:[#allocation0]]
  $region54: #{tpu_custom_call.1} parent=0
    _
  %s10 = ssub.s32 1, %s8
  %s11 = scalar_select 0, %s10, %s8
  $region1: #{tpu_custom_call.1} parent=0
    #allocation2 [shape = 'u8[8192]{0}', space=vmem, size = 0x2000, scoped, tag = 'input window, operand 0, single buffered']
    #allocation3 [shape = 's32[1]{0}', space=sflag, size = 0x4, scoped, tag = 'scoped memory for tpu_custom_call.1']
    #allocation4 [shape = 's32[1]{0}', space=sflag, size = 0x4, scoped, tag = 'scoped memory for tpu_custom_call.1']
    #allocation5 [shape = 'u8[16384]{0}', space=vmem, size = 0x4000, scoped, tag = 'input window, operand 1, single buffered']
    #allocation6 [shape = 's32[1]{0}', space=sflag, size = 0x4, scoped, tag = 'scoped memory for tpu_custom_call.1']
    #allocation7 [shape = 'u8[16384]{0}', space=vmem, size = 0x4000, scoped, tag = 'input window, operand 2, single buffered']
    #allocation8 [shape = 'u8[16384]{0}', space=vmem, size = 0x4000, scoped, tag = 'input window, operand 5, single buffered']
    #allocation9 [shape = 's32[1]{0}', space=sflag, size = 0x4, scoped, tag = 'scoped memory for tpu_custom_call.1']
    #allocation10 [shape = 'u8[8192]{0}', space=vmem, size = 0x2000, scoped, tag = 'output window, operand 0, single buffered']
    %12 = vsyncpa [#allocation3], 0
    %13 = vsyncpa [#allocation6], 0
    %14 = vsyncpa [#allocation9], 0
    %15 = vsyncpa [#allocation4], 0
    // Predicated region
    $region2: #{tpu_custom_call.1} parent=1 // pred_check
      _
    $region3: #{tpu_custom_call.1} parent=1 // pred_check_branch
      %17 = sbr.rel (0) target = $region5
    $region4: #{tpu_custom_call.1} parent=1 // pred_region
      %s19 = ssub.s32 256, 256
      %20 = vsyncadd [#allocation3], %s19
      %s21 = sshll.u32 [#allocation2], 4
      %s22 = int_to_ptr.vmem [resolvable:$true] %s21
      %27 = dma.hbm_to_vmem [thread:$0]  %s0, 256, %s22, [#allocation3], 128, 128, 8
    $region5: #{tpu_custom_call.1} parent=1 // pred_fallthru
      _
    // Predicated region
    $region6: #{tpu_custom_call.1} parent=1 // pred_check
      _
    $region7: #{tpu_custom_call.1} parent=1 // pred_check_branch
      %29 = sbr.rel (0) target = $region9
    $region8: #{tpu_custom_call.1} parent=1 // pred_region
      %s31 = ssub.s32 512, 512
      %32 = vsyncadd [#allocation6], %s31
      %s33 = sshll.u32 [#allocation5], 4
      %s34 = int_to_ptr.vmem [resolvable:$true] %s33
      %39 = dma.hbm_to_vmem [thread:$0]  %s1, 512, %s34, [#allocation6], 128, 128, 8
    $region9: #{tpu_custom_call.1} parent=1 // pred_fallthru
      _
    // Predicated region
    $region10: #{tpu_custom_call.1} parent=1 // pred_check
      _
    $region11: #{tpu_custom_call.1} parent=1 // pred_check_branch
      %41 = sbr.rel (0) target = $region13
    $region12: #{tpu_custom_call.1} parent=1 // pred_region
      %s43 = ssub.s32 512, 512
      %44 = vsyncadd [#allocation6], %s43
      %s45 = sshll.u32 [#allocation7], 4
      %s46 = int_to_ptr.vmem [resolvable:$true] %s45
      %51 = dma.hbm_to_vmem [thread:$0]  %s2, 512, %s46, [#allocation6], 128, 128, 8
    $region13: #{tpu_custom_call.1} parent=1 // pred_fallthru
      _
    // Predicated region
    $region14: #{tpu_custom_call.1} parent=1 // pred_check
      _
    $region15: #{tpu_custom_call.1} parent=1 // pred_check_branch
      %53 = sbr.rel (0) target = $region17
    $region16: #{tpu_custom_call.1} parent=1 // pred_region
      _
    $region17: #{tpu_custom_call.1} parent=1 // pred_fallthru
      _
    // Predicated region
    $region18: #{tpu_custom_call.1} parent=1 // pred_check
      _
    $region19: #{tpu_custom_call.1} parent=1 // pred_check_branch
      %55 = sbr.rel (0) target = $region21
    $region20: #{tpu_custom_call.1} parent=1 // pred_region
      _
    $region21: #{tpu_custom_call.1} parent=1 // pred_fallthru
      _
    // Predicated region
    $region22: #{tpu_custom_call.1} parent=1 // pred_check
      _
    $region23: #{tpu_custom_call.1} parent=1 // pred_check_branch
      %57 = sbr.rel (0) target = $region25
    $region24: #{tpu_custom_call.1} parent=1 // pred_region
      %s59 = ssub.s32 512, 512
      %60 = vsyncadd [#allocation9], %s59
      %s61 = sshll.u32 [#allocation8], 4
      %s62 = int_to_ptr.vmem [resolvable:$true] %s61
      %67 = dma.hbm_to_vmem [thread:$0]  %s5, 512, %s62, [#allocation9], 128, 128, 8
    $region25: #{tpu_custom_call.1} parent=1 // pred_fallthru
      _
    // Predicated region
    $region26: #{tpu_custom_call.1} parent=1 // pred_check
      _
    $region27: #{tpu_custom_call.1} parent=1 // pred_check_branch
      %69 = sbr.rel (0) target = $region29
    $region28: #{tpu_custom_call.1} parent=1 // pred_region
      _
    $region29: #{tpu_custom_call.1} parent=1 // pred_fallthru
      _
    // Predicated region
    $region30: #{tpu_custom_call.1} parent=1 // pred_check
      _
    $region31: #{tpu_custom_call.1} parent=1 // pred_check_branch
      %71 = sbr.rel (0) target = $region33
    $region32: #{tpu_custom_call.1} parent=1 // pred_region
      %72 = dma.done [#allocation3], 256
    $region33: #{tpu_custom_call.1} parent=1 // pred_fallthru
      _
    // Predicated region
    $region34: #{tpu_custom_call.1} parent=1 // pred_check
      _
    $region35: #{tpu_custom_call.1} parent=1 // pred_check_branch
      %74 = sbr.rel (0) target = $region37
    $region36: #{tpu_custom_call.1} parent=1 // pred_region
      %75 = dma.done [#allocation6], 512
    $region37: #{tpu_custom_call.1} parent=1 // pred_fallthru
      _
    // Predicated region
    $region38: #{tpu_custom_call.1} parent=1 // pred_check
      _
    $region39: #{tpu_custom_call.1} parent=1 // pred_check_branch
      %77 = sbr.rel (0) target = $region41
    $region40: #{tpu_custom_call.1} parent=1 // pred_region
      %78 = dma.done [#allocation6], 512
    $region41: #{tpu_custom_call.1} parent=1 // pred_fallthru
      _
    // Predicated region
    $region42: #{tpu_custom_call.1} parent=1 // pred_check
      _
    $region43: #{tpu_custom_call.1} parent=1 // pred_check_branch
      %80 = sbr.rel (0) target = $region45
    $region44: #{tpu_custom_call.1} parent=1 // pred_region
      %81 = dma.done [#allocation9], 512
    $region45: #{tpu_custom_call.1} parent=1 // pred_fallthru
      _
    %v82 = vld [vmem:[#allocation2] sm:$0xff]
    %v83 = vld [vmem:[#allocation2 + $0x8] sm:$0xff]
    %v84 = vld [vmem:[#allocation5] sm:$0xff]
    %v85 = vld [vmem:[#allocation5 + $0x8] sm:$0xff]
    %v86 = vld [vmem:[#allocation5 + $0x10] sm:$0xff]
    %v87 = vld [vmem:[#allocation5 + $0x18] sm:$0xff]
    %v88 = vld [vmem:[%s3] sm:$0x1]
    %v90 = vlaneseq
    %v91 = vshrl.u32 %v90, 7
    %v92 = vsub.s32 0, %v91
    %v93 = vrot.slane %v88, %v92
    %vm95 = vcmask 261120
    %v97 = vsel %vm95, %v82, 0
    %v100 = vsel %vm95, %v83, 0
    %102 = vmatprep.subr.mxu0 0.0
    %103 = vmatpush1.msra.mxu0 %v84
    %104 = vmatprep.subr.mxu0 0.0
    %105 = vmatpush1.msra.mxu0 %v85
    %106 = vmatprep.subr.mxu0 0.0
    %107 = vmatpush1.msra.mxu0 %v86
    %108 = vmatprep.subr.mxu0 0.0
    %109 = vmatpush1.msra.mxu0 %v87
    %110 = vmatprep.subr.mxu0 0.0
    %111 = vmatpush1.msra.mxu0 0.0
    %112 = vmatprep.subr.mxu0 0.0
    %113 = vmatpush1.msra.mxu0 0.0
    %114 = vmatprep.subr.mxu0 0.0
    %115 = vmatpush1.msra.mxu0 0.0
    %116 = vmatprep.subr.mxu0 0.0
    %117 = vmatpush1.msra.mxu0 0.0
    %118 = vmatprep.subr.mxu0 0.0
    %119 = vmatpush1.msra.mxu0 0.0
    %120 = vmatprep.subr.mxu0 0.0
    %121 = vmatpush1.msra.mxu0 0.0
    %122 = vmatprep.subr.mxu0 0.0
    %123 = vmatpush1.msra.mxu0 0.0
    %124 = vmatprep.subr.mxu0 0.0
    %125 = vmatpush1.msra.mxu0 0.0
    %126 = vmatprep.subr.mxu0 0.0
    %127 = vmatpush1.msra.mxu0 0.0
    %128 = vmatprep.subr.mxu0 0.0
    %129 = vmatpush1.msra.mxu0 0.0
    %130 = vmatprep.subr.mxu0 0.0
    %131 = vmatpush1.msra.mxu0 0.0
    %132 = vmatprep.subr.mxu0 0.0
    %133 = vmatpush1.msra.mxu0 0.0
    %134 = vmatprep.subr.mxu0 0.0
    %135 = vmatpush1.msra.mxu0 0.0
    %136 = vmatprep.subr.mxu0 0.0
    %137 = vmatpush1.msra.mxu0 0.0
    %138 = vmatprep.subr.mxu0 0.0
    %139 = vmatpush1.msra.mxu0 0.0
    %140 = vmatprep.subr.mxu0 0.0
    %141 = vmatpush1.msra.mxu0 0.0
    %142 = vmatprep.subr.mxu0 0.0
    %143 = vmatpush1.msra.mxu0 0.0
    %144 = vmatprep.subr.mxu0 0.0
    %145 = vmatpush1.msra.mxu0 0.0
    %146 = vmatprep.subr.mxu0 0.0
    %147 = vmatpush1.msra.mxu0 0.0
    %148 = vmatprep.subr.mxu0 0.0
    %149 = vmatpush1.msra.mxu0 0.0
    %150 = vmatprep.subr.mxu0 0.0
    %151 = vmatpush1.msra.mxu0 0.0
    %152 = vmatprep.subr.mxu0 0.0
    %153 = vmatpush1.msra.mxu0 0.0
    %154 = vmatprep.subr.mxu0 0.0
    %155 = vmatpush1.msra.mxu0 0.0
    %156 = vmatprep.subr.mxu0 0.0
    %157 = vmatpush1.msra.mxu0 0.0
    %158 = vmatprep.subr.mxu0 0.0
    %159 = vmatpush1.msra.mxu0 0.0
    %160 = vmatprep.subr.mxu0 0.0
    %161 = vmatpush1.msra.mxu0 0.0
    %162 = vmatprep.subr.mxu0 0.0
    %163 = vmatpush1.msra.mxu0 0.0
    %164 = vmatprep.subr.mxu0 0.0
    %165 = vmatpush1.msra.mxu0 0.0
    %166 = vmatprep.mubr.f32.mxu0 0.0
    %167 = vmatmul.mubr.f32.gmra.mrb[0].mxu0 %v97
    %v168 = vpop.f32.mrb[0].mxu0
    %v169 = vadd.f32 %v93, %v168
    %v170 = vpop.f32.mrb[0].mxu0
    %171 = vmatprep.mubr.f32.mxu0 0.0
    %172 = vmatmul.mubr.f32.gmra.mrb[0].mxu0 %v100
    %v173 = vpop.f32.mrb[0].mxu0
    %v174 = vadd.f32 %v93, %v173
    %v175 = vpop.f32.mrb[0].mxu0
    %176 = vdwg.mxu0
    %v177 = vld [vmem:[#allocation7] sm:$0xff]
    %v178 = vld [vmem:[#allocation7 + $0x8] sm:$0xff]
    %v179 = vld [vmem:[#allocation7 + $0x10] sm:$0xff]
    %v180 = vld [vmem:[#allocation7 + $0x18] sm:$0xff]
    %v181 = vld [vmem:[%s4] sm:$0x1]
    %v183 = vlaneseq
    %v184 = vshrl.u32 %v183, 7
    %v185 = vsub.s32 0, %v184
    %v186 = vrot.slane %v181, %v185
    %188 = vmatprep.subr.mxu0 0.0
    %189 = vmatpush1.msra.mxu0 %v177
    %190 = vmatprep.subr.mxu0 0.0
    %191 = vmatpush1.msra.mxu0 %v178
    %192 = vmatprep.subr.mxu0 0.0
    %193 = vmatpush1.msra.mxu0 %v179
    %194 = vmatprep.subr.mxu0 0.0
    %195 = vmatpush1.msra.mxu0 %v180
    %196 = vmatprep.subr.mxu0 0.0
    %197 = vmatpush1.msra.mxu0 0.0
    %198 = vmatprep.subr.mxu0 0.0
    %199 = vmatpush1.msra.mxu0 0.0
    %200 = vmatprep.subr.mxu0 0.0
    %201 = vmatpush1.msra.mxu0 0.0
    %202 = vmatprep.subr.mxu0 0.0
    %203 = vmatpush1.msra.mxu0 0.0
    %204 = vmatprep.subr.mxu0 0.0
    %205 = vmatpush1.msra.mxu0 0.0
    %206 = vmatprep.subr.mxu0 0.0
    %207 = vmatpush1.msra.mxu0 0.0
    %208 = vmatprep.subr.mxu0 0.0
    %209 = vmatpush1.msra.mxu0 0.0
    %210 = vmatprep.subr.mxu0 0.0
    %211 = vmatpush1.msra.mxu0 0.0
    %212 = vmatprep.subr.mxu0 0.0
    %213 = vmatpush1.msra.mxu0 0.0
    %214 = vmatprep.subr.mxu0 0.0
    %215 = vmatpush1.msra.mxu0 0.0
    %216 = vmatprep.subr.mxu0 0.0
    %217 = vmatpush1.msra.mxu0 0.0
    %218 = vmatprep.subr.mxu0 0.0
    %219 = vmatpush1.msra.mxu0 0.0
    %220 = vmatprep.subr.mxu0 0.0
    %221 = vmatpush1.msra.mxu0 0.0
    %222 = vmatprep.subr.mxu0 0.0
    %223 = vmatpush1.msra.mxu0 0.0
    %224 = vmatprep.subr.mxu0 0.0
    %225 = vmatpush1.msra.mxu0 0.0
    %226 = vmatprep.subr.mxu0 0.0
    %227 = vmatpush1.msra.mxu0 0.0
    %228 = vmatprep.subr.mxu0 0.0
    %229 = vmatpush1.msra.mxu0 0.0
    %230 = vmatprep.subr.mxu0 0.0
    %231 = vmatpush1.msra.mxu0 0.0
    %232 = vmatprep.subr.mxu0 0.0
    %233 = vmatpush1.msra.mxu0 0.0
    %234 = vmatprep.subr.mxu0 0.0
    %235 = vmatpush1.msra.mxu0 0.0
    %236 = vmatprep.subr.mxu0 0.0
    %237 = vmatpush1.msra.mxu0 0.0
    %238 = vmatprep.subr.mxu0 0.0
    %239 = vmatpush1.msra.mxu0 0.0
    %240 = vmatprep.subr.mxu0 0.0
    %241 = vmatpush1.msra.mxu0 0.0
    %242 = vmatprep.subr.mxu0 0.0
    %243 = vmatpush1.msra.mxu0 0.0
    %244 = vmatprep.subr.mxu0 0.0
    %245 = vmatpush1.msra.mxu0 0.0
    %246 = vmatprep.subr.mxu0 0.0
    %247 = vmatpush1.msra.mxu0 0.0
    %248 = vmatprep.subr.mxu0 0.0
    %249 = vmatpush1.msra.mxu0 0.0
    %250 = vmatprep.subr.mxu0 0.0
    %251 = vmatpush1.msra.mxu0 0.0
    %252 = vmatprep.mubr.f32.mxu0 0.0
    %253 = vmatmul.mubr.f32.gmra.mrb[0].mxu0 %v97
    %v254 = vpop.f32.mrb[0].mxu0
    %v255 = vadd.f32 %v186, %v254
    %v256 = vpop.f32.mrb[0].mxu0
    %257 = vmatprep.mubr.f32.mxu0 0.0
    %258 = vmatmul.mubr.f32.gmra.mrb[0].mxu0 %v100
    %v259 = vpop.f32.mrb[0].mxu0
    %v260 = vadd.f32 %v186, %v259
    %v261 = vpop.f32.mrb[0].mxu0
    %262 = vdwg.mxu0
    %v263 = vxor.u32 %v255, 2147483648
    %v264 = vxor.u32 %v260, 2147483648
    %v265 = vmul.f32 %v263, 1.442695
    %v266 = vpow.pop %v265
    %v267 = vmul.f32 %v264, 1.442695
    %v268 = vpow.pop %v267
    %v269 = vadd.f32 %v266, 1.0
    %v270 = vadd.f32 %v268, 1.0
    %v271 = vrcp.pop %v269
    %v272 = vmul.f32 1.0, %v271
    %v273 = vrcp.pop %v270
    %v274 = vmul.f32 1.0, %v273
    %v275 = vmul.f32 %v169, %v272
    %v276 = vmul.f32 %v174, %v274
    %v277 = vld [vmem:[#allocation8] sm:$0xff]
    %v278 = vld [vmem:[#allocation8 + $0x8] sm:$0xff]
    %v279 = vld [vmem:[#allocation8 + $0x10] sm:$0xff]
    %v280 = vld [vmem:[#allocation8 + $0x18] sm:$0xff]
    %v281 = vld [vmem:[%s6] sm:$0x1]
    %v283 = vlaneseq
    %v284 = vshrl.u32 %v283, 7
    %v285 = vsub.s32 0, %v284
    %v286 = vrot.slane %v281, %v285
    %v289 = vsel %vm95, %v275, 0
    %v292 = vsel %vm95, %v276, 0
    %294 = vmatprep.subr.mxu0 0.0
    %295 = vmatpush1.msra.mxu0 %v277
    %296 = vmatprep.subr.mxu0 0.0
    %297 = vmatpush1.msra.mxu0 %v278
    %298 = vmatprep.subr.mxu0 0.0
    %299 = vmatpush1.msra.mxu0 %v279
    %300 = vmatprep.subr.mxu0 0.0
    %301 = vmatpush1.msra.mxu0 %v280
    %302 = vmatprep.subr.mxu0 0.0
    %303 = vmatpush1.msra.mxu0 0.0
    %304 = vmatprep.subr.mxu0 0.0
    %305 = vmatpush1.msra.mxu0 0.0
    %306 = vmatprep.subr.mxu0 0.0
    %307 = vmatpush1.msra.mxu0 0.0
    %308 = vmatprep.subr.mxu0 0.0
    %309 = vmatpush1.msra.mxu0 0.0
    %310 = vmatprep.subr.mxu0 0.0
    %311 = vmatpush1.msra.mxu0 0.0
    %312 = vmatprep.subr.mxu0 0.0
    %313 = vmatpush1.msra.mxu0 0.0
    %314 = vmatprep.subr.mxu0 0.0
    %315 = vmatpush1.msra.mxu0 0.0
    %316 = vmatprep.subr.mxu0 0.0
    %317 = vmatpush1.msra.mxu0 0.0
    %318 = vmatprep.subr.mxu0 0.0
    %319 = vmatpush1.msra.mxu0 0.0
    %320 = vmatprep.subr.mxu0 0.0
    %321 = vmatpush1.msra.mxu0 0.0
    %322 = vmatprep.subr.mxu0 0.0
    %323 = vmatpush1.msra.mxu0 0.0
    %324 = vmatprep.subr.mxu0 0.0
    %325 = vmatpush1.msra.mxu0 0.0
    %326 = vmatprep.subr.mxu0 0.0
    %327 = vmatpush1.msra.mxu0 0.0
    %328 = vmatprep.subr.mxu0 0.0
    %329 = vmatpush1.msra.mxu0 0.0
    %330 = vmatprep.subr.mxu0 0.0
    %331 = vmatpush1.msra.mxu0 0.0
    %332 = vmatprep.subr.mxu0 0.0
    %333 = vmatpush1.msra.mxu0 0.0
    %334 = vmatprep.subr.mxu0 0.0
    %335 = vmatpush1.msra.mxu0 0.0
    %336 = vmatprep.subr.mxu0 0.0
    %337 = vmatpush1.msra.mxu0 0.0
    %338 = vmatprep.subr.mxu0 0.0
    %339 = vmatpush1.msra.mxu0 0.0
    %340 = vmatprep.subr.mxu0 0.0
    %341 = vmatpush1.msra.mxu0 0.0
    %342 = vmatprep.subr.mxu0 0.0
    %343 = vmatpush1.msra.mxu0 0.0
    %344 = vmatprep.subr.mxu0 0.0
    %345 = vmatpush1.msra.mxu0 0.0
    %346 = vmatprep.subr.mxu0 0.0
    %347 = vmatpush1.msra.mxu0 0.0
    %348 = vmatprep.subr.mxu0 0.0
    %349 = vmatpush1.msra.mxu0 0.0
    %350 = vmatprep.subr.mxu0 0.0
    %351 = vmatpush1.msra.mxu0 0.0
    %352 = vmatprep.subr.mxu0 0.0
    %353 = vmatpush1.msra.mxu0 0.0
    %354 = vmatprep.subr.mxu0 0.0
    %355 = vmatpush1.msra.mxu0 0.0
    %356 = vmatprep.subr.mxu0 0.0
    %357 = vmatpush1.msra.mxu0 0.0
    %358 = vmatprep.mubr.f32.mxu0 0.0
    %359 = vmatmul.mubr.f32.gmra.mrb[0].mxu0 %v289
    %v360 = vpop.f32.mrb[0].mxu0
    %v361 = vadd.f32 %v286, %v360
    %v362 = vpop.f32.mrb[0].mxu0
    %363 = vmatprep.mubr.f32.mxu0 0.0
    %364 = vmatmul.mubr.f32.gmra.mrb[0].mxu0 %v292
    %v365 = vpop.f32.mrb[0].mxu0
    %v366 = vadd.f32 %v286, %v365
    %v367 = vpop.f32.mrb[0].mxu0
    %368 = vdwg.mxu0
    %369 = vst.msk [vmem:[#allocation10] sm:$0xff] %vm95, %v361
    %370 = vst.msk [vmem:[#allocation10 + $0x8] sm:$0xff] %vm95, %v366
    // Predicated region
    $region46: #{tpu_custom_call.1} parent=1 // pred_check
      _
    $region47: #{tpu_custom_call.1} parent=1 // pred_check_branch
      %372 = sbr.rel (0) target = $region49
    $region48: #{tpu_custom_call.1} parent=1 // pred_region
      %s374 = ssub.s32 256, 256
      %375 = vsyncadd [#allocation4], %s374
      %s376 = sshll.u32 [#allocation10], 4
      %s377 = int_to_ptr.vmem [resolvable:$true] %s376
      %382 = dma.vmem_to_hbm [thread:$0]  %s377, 256, %s7, [#allocation4], 128, 128, 8
    $region49: #{tpu_custom_call.1} parent=1 // pred_fallthru
      _
    // Predicated region
    $region50: #{tpu_custom_call.1} parent=1 // pred_check
      _
    $region51: #{tpu_custom_call.1} parent=1 // pred_check_branch
      %384 = sbr.rel (0) target = $region53
    $region52: #{tpu_custom_call.1} parent=1 // pred_region
      %385 = dma.done [#allocation4], 256
    $region53: #{tpu_custom_call.1} parent=1 // pred_fallthru
      _
    %386 = vsyncpa [#allocation3], 1
    %387 = vsyncpa [#allocation6], 1
    %388 = vsyncpa [#allocation9], 1
    %389 = vsyncpa [#allocation4], 1

</llo_original>
